<compile_context>
chip_gen: v7x
topology: tpu7x:2x2x1
jax: 0.10.0
libtpu: 0.0.40
codegen_flags: <defaults>
</compile_context>

<pallas_src>
import jax
import jax.numpy as jnp
from jax import lax
from jax.experimental import pallas as pl
from jax.experimental.pallas import tpu as pltpu


def _attention_kernel(prompt_ref, w_ref, b_ref, docs_ref, out_ref):
    pack_w = out_ref.shape[-1] // 2          # 128-lane-aligned slab width

    # query = prompt @ W + b                  (tile_m, d_model), f32 MXU accumulate
    q = jnp.dot(prompt_ref[...], w_ref[...], preferred_element_type=jnp.float32)
    q = q + b_ref[...]

    keys = docs_ref[...]                      # (num_sections, d_model)
    num_sections, d_model = keys.shape

    # attention_scores = q @ K^T : contract the shared last axis directly,
    # avoiding an explicit transpose of the docs tile.
    s = lax.dot_general(q, keys, (((1,), (1,)), ((), ())),
                        preferred_element_type=jnp.float32)
    s = s * (float(d_model) ** -0.5)          # matches softmax(scores / d**0.5)

    # Numerically stable softmax; reciprocal via EUP estimate + 1 Newton step.
    m = jnp.max(s, axis=-1, keepdims=True)
    e = jnp.exp(s - m)
    denom = jnp.sum(e, axis=-1, keepdims=True)
    r = pl.reciprocal(denom, approx=True)
    r = r * (2.0 - denom * r)                 # restores full f32 precision
    p = e * r                                 # (tile_m, num_sections)

    # weighted_values = p @ V                  (tile_m, d_model)
    wv = jnp.dot(p, keys, preferred_element_type=jnp.float32)

    # Lane-dense packed output block: [scores | pad | weighted | pad].
    out_ref[...] = jnp.zeros(out_ref.shape, out_ref.dtype)
    out_ref[:, 0:num_sections] = p.astype(out_ref.dtype)
    out_ref[:, pack_w:pack_w + d_model] = wv.astype(out_ref.dtype)


def attention_with_prompt(prompt, w, b, document_sections, *, tile_m=8):
    """prompt: (num_prompts, orig_d)  [num_prompts may be 1, as in the module],
    w: (orig_d, d_model) (pre-transposed vs PyTorch Linear), b: (1, d_model),
    document_sections: (num_sections, d_model).
    Returns (attention_scores (num_prompts, num_sections),
             weighted_values  (num_prompts, d_model))."""
    n_prompts, orig_d = prompt.shape
    num_sections, d_model = document_sections.shape

    tile_m = max(8, tile_m)                               # sublane-aligned tile
    n_pad = tile_m * pl.cdiv(n_prompts, tile_m)
    if n_pad != n_prompts:
        prompt = jnp.pad(prompt, ((0, n_pad - n_prompts), (0, 0)))

    pack_w = 128 * pl.cdiv(max(num_sections, d_model), 128)
    grid = (n_pad // tile_m,)

    flops = 2 * n_pad * (orig_d * d_model + 2 * num_sections * d_model)
    bytes_accessed = 4 * (n_pad * orig_d + orig_d * d_model + d_model
                          + num_sections * d_model + n_pad * 2 * pack_w)

    packed = pl.pallas_call(
        _attention_kernel,
        out_shape=jax.ShapeDtypeStruct((n_pad, 2 * pack_w), jnp.float32),
        grid=grid,
        in_specs=[
            pl.BlockSpec((tile_m, orig_d), lambda i: (i, 0)),        # prompts (tiled)
            pl.BlockSpec((orig_d, d_model), lambda i: (0, 0)),       # W (resident)
            pl.BlockSpec((1, d_model), lambda i: (0, 0)),            # bias
            pl.BlockSpec((num_sections, d_model), lambda i: (0, 0)), # docs (K == V)
        ],
        out_specs=pl.BlockSpec((tile_m, 2 * pack_w), lambda i: (i, 0)),
        compiler_params=pltpu.CompilerParams(
            dimension_semantics=("parallel",)),
        cost_estimate=pl.CostEstimate(
            flops=flops,
            transcendentals=n_pad * num_sections,
            bytes_accessed=bytes_accessed),
    )(prompt, w, b, document_sections)

    scores = packed[:n_prompts, :num_sections]
    weighted = packed[:n_prompts, pack_w:pack_w + d_model]
    return scores, weighted


def _reference(prompt, w, b, docs):
    q = prompt @ w + b
    s = q @ docs.T
    p = jax.nn.softmax(s / (docs.shape[-1] ** 0.5), axis=-1)
    return p, p @ docs


if __name__ == "__main__":
    original_d_model = 32
    d_model = 16
    num_sections = 8
    num_prompts = 16   # batched demo: one pallas_call amortizes launch/DMA cost

    key = jax.random.PRNGKey(0)
    k_prompt, k_docs, k_w, k_b = jax.random.split(key, 4)

    # Deterministic synthetic parameters (PyTorch Linear-style uniform init).
    bound = 1.0 / (original_d_model ** 0.5)
    w = jax.random.uniform(k_w, (original_d_model, d_model),
                           minval=-bound, maxval=bound, dtype=jnp.float32)
    b = jax.random.uniform(k_b, (1, d_model),
                           minval=-bound, maxval=bound, dtype=jnp.float32)

    prompts = jax.random.normal(k_prompt, (num_prompts, original_d_model),
                                dtype=jnp.float32)
    document_sections = jax.random.normal(k_docs, (num_sections, d_model),
                                          dtype=jnp.float32)

    # Batched path (grid over prompt tiles, 2 grid steps).
    scores, weighted = attention_with_prompt(prompts, w, b, document_sections)
    jax.block_until_ready((scores, weighted))
    ref_scores, ref_weighted = _reference(prompts, w, b, document_sections)
    assert scores.shape == (num_prompts, num_sections)
    assert weighted.shape == (num_prompts, d_model)
    assert jnp.allclose(scores, ref_scores, atol=1e-5, rtol=1e-4)
    assert jnp.allclose(weighted, ref_weighted, atol=1e-5, rtol=1e-4)

    # Original module signature: a single (1, original_d_model) prompt.
    scores1, weighted1 = attention_with_prompt(prompts[:1], w, b,
                                               document_sections)
    jax.block_until_ready((scores1, weighted1))
    assert scores1.shape == (1, num_sections)
    assert weighted1.shape == (1, d_model)
    assert jnp.allclose(scores1, ref_scores[:1], atol=1e-5, rtol=1e-4)
    assert jnp.allclose(weighted1, ref_weighted[:1], atol=1e-5, rtol=1e-4)

    print("KERNEL_OK")
</pallas_src>

<mosaic_0001>
module attributes {stable_mosaic.version = 11 : i64} {
  func.func @_attention_kernel(%arg0: i32, %arg1: memref<8x32xf32, #tpu.memory_space<vmem>>, %arg2: memref<32x16xf32, #tpu.memory_space<vmem>>, %arg3: memref<1x16xf32, #tpu.memory_space<vmem>>, %arg4: memref<8x16xf32, #tpu.memory_space<vmem>>, %arg5: memref<8x256xf32, #tpu.memory_space<vmem>>) attributes {dimension_semantics = [#tpu.dimension_semantics<parallel>], iteration_bounds = array<i64: 2>, scalar_prefetch = 0 : i64, scratch_operands = 0 : i64, tpu.core_type = #tpu.core_type<tc>, window_params = [{transform_indices = @transform_0, window_bounds = array<i64: 8, 32>}, {pipeline_mode = #tpu.pipeline_mode<synchronous>, transform_indices = @transform_1, window_bounds = array<i64: 32, 16>}, {pipeline_mode = #tpu.pipeline_mode<synchronous>, transform_indices = @transform_2, window_bounds = array<i64: 1, 16>}, {pipeline_mode = #tpu.pipeline_mode<synchronous>, transform_indices = @transform_3, window_bounds = array<i64: 8, 16>}, {transform_indices = @transform_4, window_bounds = array<i64: 8, 256>}]} {
    %c0 = arith.constant 0 : index
    %c0_0 = arith.constant 0 : index
    %0 = vector.load %arg1[%c0, %c0_0] : memref<8x32xf32, #tpu.memory_space<vmem>>, vector<8x32xf32>
    %c0_1 = arith.constant 0 : index
    %c0_2 = arith.constant 0 : index
    %1 = vector.load %arg2[%c0_1, %c0_2] : memref<32x16xf32, #tpu.memory_space<vmem>>, vector<32x16xf32>
    %cst = arith.constant dense<0.000000e+00> : vector<8x16xf32>
    %2 = tpu.matmul %0, %1, %cst {dimension_numbers = #tpu.dot_dimension_numbers<[1], [0], [0], [1], [0, 0, 1, 1], [], []>} : vector<8x32xf32>, vector<32x16xf32>, vector<8x16xf32> -> vector<8x16xf32>
    %c0_3 = arith.constant 0 : index
    %c0_4 = arith.constant 0 : index
    %3 = vector.load %arg3[%c0_3, %c0_4] : memref<1x16xf32, #tpu.memory_space<vmem>>, vector<1x16xf32>
    %4 = vector.broadcast %3 : vector<1x16xf32> to vector<8x16xf32>
    %5 = arith.addf %2, %4 : vector<8x16xf32>
    %c0_5 = arith.constant 0 : index
    %c0_6 = arith.constant 0 : index
    %6 = vector.load %arg4[%c0_5, %c0_6] : memref<8x16xf32, #tpu.memory_space<vmem>>, vector<8x16xf32>
    %cst_7 = arith.constant dense<0.000000e+00> : vector<8x8xf32>
    %7 = tpu.matmul %5, %6, %cst_7 {dimension_numbers = #tpu.dot_dimension_numbers<[1], [1], [0], [0], [0, 0, 1, 0], [], []>} : vector<8x16xf32>, vector<8x16xf32>, vector<8x8xf32> -> vector<8x8xf32>
    %cst_8 = arith.constant 2.500000e-01 : f32
    %8 = vector.broadcast %cst_8 : f32 to vector<8x8xf32>
    %9 = arith.mulf %7, %8 : vector<8x8xf32>
    %cst_9 = arith.constant dense<0xFF800000> : vector<8xf32>
    %10 = vector.multi_reduction <maximumf>, %9, %cst_9 [1] : vector<8x8xf32> to vector<8xf32>
    %11 = vector.shape_cast %10 : vector<8xf32> to vector<8x1xf32>
    %12 = vector.broadcast %11 : vector<8x1xf32> to vector<8x8xf32>
    %13 = arith.subf %9, %12 : vector<8x8xf32>
    %14 = math.exp %13 : vector<8x8xf32>
    %cst_10 = arith.constant dense<0.000000e+00> : vector<8xf32>
    %15 = vector.multi_reduction <add>, %14, %cst_10 [1] : vector<8x8xf32> to vector<8xf32>
    %16 = vector.shape_cast %15 : vector<8xf32> to vector<8x1xf32>
    %17 = tpu.reciprocal %16 {approx = true} : vector<8x1xf32> -> vector<8x1xf32>
    %18 = arith.mulf %16, %17 : vector<8x1xf32>
    %cst_11 = arith.constant 2.000000e+00 : f32
    %19 = vector.broadcast %cst_11 : f32 to vector<8x1xf32>
    %20 = arith.subf %19, %18 : vector<8x1xf32>
    %21 = arith.mulf %17, %20 : vector<8x1xf32>
    %22 = vector.broadcast %21 : vector<8x1xf32> to vector<8x8xf32>
    %23 = arith.mulf %14, %22 : vector<8x8xf32>
    %cst_12 = arith.constant dense<0.000000e+00> : vector<8x16xf32>
    %24 = tpu.matmul %23, %6, %cst_12 {dimension_numbers = #tpu.dot_dimension_numbers<[1], [0], [0], [1], [0, 0, 1, 1], [], []>} : vector<8x8xf32>, vector<8x16xf32>, vector<8x16xf32> -> vector<8x16xf32>
    %cst_13 = arith.constant 0.000000e+00 : f32
    %25 = vector.broadcast %cst_13 : f32 to vector<8x256xf32>
    %c0_14 = arith.constant 0 : index
    %c0_15 = arith.constant 0 : index
    %26 = vector.load %arg5[%c0_14, %c0_15] : memref<8x256xf32, #tpu.memory_space<vmem>>, vector<8x256xf32>
    tpu.vector_store %arg5[%c0_14, %c0_15], %25 {strides = array<i32>} : memref<8x256xf32, #tpu.memory_space<vmem>>, vector<8x256xf32>,
    %c0_16 = arith.constant 0 : index
    %c0_17 = arith.constant 0 : index
    %27 = vector.load %arg5[%c0_16, %c0_17] : memref<8x256xf32, #tpu.memory_space<vmem>>, vector<8x8xf32>
    tpu.vector_store %arg5[%c0_16, %c0_17], %23 {strides = array<i32>} : memref<8x256xf32, #tpu.memory_space<vmem>>, vector<8x8xf32>,
    %c0_18 = arith.constant 0 : index
    %c128 = arith.constant 128 : index
    %28 = vector.load %arg5[%c0_18, %c128] : memref<8x256xf32, #tpu.memory_space<vmem>>, vector<8x16xf32>
    tpu.vector_store %arg5[%c0_18, %c128], %24 {strides = array<i32>} : memref<8x256xf32, #tpu.memory_space<vmem>>, vector<8x16xf32>,
    return
  }
  func.func @transform_0(%arg0: i32) -> (i32, i32) {
    %c0_i32 = arith.constant 0 : i32
    %c0_i32_0 = arith.constant 0 : i32
    return %arg0, %c0_i32 : i32, i32
  }
  func.func @transform_1(%arg0: i32) -> (i32, i32) {
    %c0_i32 = arith.constant 0 : i32
    %c0_i32_0 = arith.constant 0 : i32
    %c0_i32_1 = arith.constant 0 : i32
    return %c0_i32, %c0_i32_0 : i32, i32
  }
  func.func @transform_2(%arg0: i32) -> (i32, i32) {
    %c0_i32 = arith.constant 0 : i32
    %c0_i32_0 = arith.constant 0 : i32
    %c0_i32_1 = arith.constant 0 : i32
    return %c0_i32, %c0_i32_0 : i32, i32
  }
  func.func @transform_3(%arg0: i32) -> (i32, i32) {
    %c0_i32 = arith.constant 0 : i32
    %c0_i32_0 = arith.constant 0 : i32
    %c0_i32_1 = arith.constant 0 : i32
    return %c0_i32, %c0_i32_0 : i32, i32
  }
  func.func @transform_4(%arg0: i32) -> (i32, i32) {
    %c0_i32 = arith.constant 0 : i32
    %c0_i32_0 = arith.constant 0 : i32
    return %arg0, %c0_i32 : i32, i32
  }
}

</mosaic_0001>

<llo_original>
// kernel: tpu_custom_call.1
$region0: #{tpu_custom_call.1}
  #allocation0 [shape = 'u32[]', space=smem, size = 0x4, offset = 0x4, fixed_abs, tag = 'smem constant byte address 0x4 - core index']
  #allocation1 [shape = 'u32[144,128]{1,0:T(1,128)}', space=vmem, size = 0x12000, scoped, tag = 'internal scratch']
  %s0 = inlined_call_operand.vmem [shape: f32[16,32], index: 0, kind: input, shape index: {}]
  %s1 = inlined_call_operand.vmem [shape: f32[32,16], index: 1, kind: input, shape index: {}]
  %s2 = inlined_call_operand.vmem [shape: f32[1,16], index: 2, kind: input, shape index: {}]
  %s3 = inlined_call_operand.vmem [shape: f32[8,16], index: 3, kind: input, shape index: {}]
  %s4 = inlined_call_operand.hbm [shape: f32[16,256], index: 4, kind: output, shape index: {}]
  %s5 = sld [smem:[#allocation0]]
  $region49: #{tpu_custom_call.1} parent=0
    _
  %s7 = ssub.s32 1, %s5
  %s8 = scalar_select 0, %s7, %s5
  $region1: #{tpu_custom_call.1} parent=0
    #allocation2 [shape = 'u8[16384]{0}', space=vmem, size = 0x4000, scoped, tag = 'output window, operand 0']
    #allocation3 [shape = 's32[2]{0}', space=sflag, size = 0x8, scoped, tag = 'scoped memory for tpu_custom_call.1']
    %9 = vsyncpa [#allocation3], 0
    %s10 = scalar_lea.sflag [#allocation3], 1
    %11 = vsyncpa %s10, 0
    loop: start=0, step=1, limit=4
    $region2: #{tpu_custom_call.1} parent=1 // loop_pre_header
      _
    $region3: #{tpu_custom_call.1} parent=1 // loop_header
      %s13 = sphi 0, %s17
      %p14 = scmp.ge.s32.totalorder %s13, 4
      %s23 = sphi 0, %s25
      %s26 = sphi 0, %s23
      %s27 = sphi 0, %s26
      %s43 = sphi 0, %s27
      %s47 = sphi 0, %s47
      %s49 = sphi 0, %s47
      %s50 = sphi 0, %s49
      %s64 = sphi 0, %s50
      %s68 = sphi 0, %s68
      %s70 = sphi 0, %s68
      %s71 = sphi 0, %s70
      %s85 = sphi 0, %s71
      %s89 = sphi 0, %s89
      %s91 = sphi 0, %s89
      %s92 = sphi 0, %s91
      %s106 = sphi 0, %s92
      %s112 = sphi 0, %s114
      %s115 = sphi 0, %s112
      %s116 = sphi 0, %s115
      %s132 = sphi 0, %s116
    $region4: #{tpu_custom_call.1} parent=1 // loop_header_branch
      %16 = sbr.rel (%p14) target = $region8
    $region5: #{tpu_custom_call.1} parent=1 // loop_body
      %s18 = ssub.s32 %s13, 1
      %s19 = ssub.s32 %s13, 2
      %s20 = sadd.s32 %s13, 1
      %s21 = ssub.s32 %s13, %s20
      %p22 = scmp.eq.s32.totalorder %s21, 0
      %s24 = sadd.s32 %s23, 1
      %s25 = scalar_select %p22, %s23, %s24
      %p28 = pneg %p22
      %p29 = scmp.eq.s32.totalorder %s13, 1
      %p30 = por %p28, %p29
      %p31 = scmp.ne.s32.totalorder %s23, %s26
      %p32 = scmp.eq.s32.totalorder %s13, 0
      %p33 = por %p31, %p32
      %p34 = scmp.ne.s32.totalorder %s23, %s26
      %p35 = scmp.eq.s32.totalorder %s18, 1
      %p36 = por %p34, %p35
      %p37 = scmp.ne.s32.totalorder %s26, %s27
      %p38 = scmp.eq.s32.totalorder %s18, 0
      %p39 = por %p37, %p38
      %p40 = scmp.ne.s32.totalorder %s26, %s27
      %p41 = scmp.eq.s32.totalorder %s19, 1
      %p42 = por %p40, %p41
      %p44 = scmp.ne.s32.totalorder %s27, %s43
      %p45 = scmp.eq.s32.totalorder %s19, 0
      %p46 = por %p44, %p45
      %s48 = sadd.s32 %s47, 1
      %p51 = scmp.eq.s32.totalorder %s13, 1
      %p52 = scmp.ne.s32.totalorder %s47, %s49
      %p53 = scmp.eq.s32.totalorder %s13, 0
      %p54 = por %p52, %p53
      %p55 = scmp.ne.s32.totalorder %s47, %s49
      %p56 = scmp.eq.s32.totalorder %s18, 1
      %p57 = por %p55, %p56
      %p58 = scmp.ne.s32.totalorder %s49, %s50
      %p59 = scmp.eq.s32.totalorder %s18, 0
      %p60 = por %p58, %p59
      %p61 = scmp.ne.s32.totalorder %s49, %s50
      %p62 = scmp.eq.s32.totalorder %s19, 1
      %p63 = por %p61, %p62
      %p65 = scmp.ne.s32.totalorder %s50, %s64
      %p66 = scmp.eq.s32.totalorder %s19, 0
      %p67 = por %p65, %p66
      %s69 = sadd.s32 %s68, 1
      %p72 = scmp.eq.s32.totalorder %s13, 1
      %p73 = scmp.ne.s32.totalorder %s68, %s70
      %p74 = scmp.eq.s32.totalorder %s13, 0
      %p75 = por %p73, %p74
      %p76 = scmp.ne.s32.totalorder %s68, %s70
      %p77 = scmp.eq.s32.totalorder %s18, 1
      %p78 = por %p76, %p77
      %p79 = scmp.ne.s32.totalorder %s70, %s71
      %p80 = scmp.eq.s32.totalorder %s18, 0
      %p81 = por %p79, %p80
      %p82 = scmp.ne.s32.totalorder %s70, %s71
      %p83 = scmp.eq.s32.totalorder %s19, 1
      %p84 = por %p82, %p83
      %p86 = scmp.ne.s32.totalorder %s71, %s85
      %p87 = scmp.eq.s32.totalorder %s19, 0
      %p88 = por %p86, %p87
      %s90 = sadd.s32 %s89, 1
      %p93 = scmp.eq.s32.totalorder %s13, 1
      %p94 = scmp.ne.s32.totalorder %s89, %s91
      %p95 = scmp.eq.s32.totalorder %s13, 0
      %p96 = por %p94, %p95
      %p97 = scmp.ne.s32.totalorder %s89, %s91
      %p98 = scmp.eq.s32.totalorder %s18, 1
      %p99 = por %p97, %p98
      %p100 = scmp.ne.s32.totalorder %s91, %s92
      %p101 = scmp.eq.s32.totalorder %s18, 0
      %p102 = por %p100, %p101
      %p103 = scmp.ne.s32.totalorder %s91, %s92
      %p104 = scmp.eq.s32.totalorder %s19, 1
      %p105 = por %p103, %p104
      %p107 = scmp.ne.s32.totalorder %s92, %s106
      %p108 = scmp.eq.s32.totalorder %s19, 0
      %p109 = por %p107, %p108
      %s110 = ssub.s32 %s13, %s20
      %p111 = scmp.eq.s32.totalorder %s110, 0
      %s113 = sadd.s32 %s112, 1
      %s114 = scalar_select %p111, %s112, %s113
      %p117 = pneg %p111
      %p118 = scmp.eq.s32.totalorder %s13, 1
      %p119 = por %p117, %p118
      %p120 = scmp.ne.s32.totalorder %s112, %s115
      %p121 = scmp.eq.s32.totalorder %s13, 0
      %p122 = por %p120, %p121
      %p123 = scmp.ne.s32.totalorder %s112, %s115
      %p124 = scmp.eq.s32.totalorder %s18, 1
      %p125 = por %p123, %p124
      %p126 = scmp.ne.s32.totalorder %s115, %s116
      %p127 = scmp.eq.s32.totalorder %s18, 0
      %p128 = por %p126, %p127
      %p129 = scmp.ne.s32.totalorder %s115, %s116
      %p130 = scmp.eq.s32.totalorder %s19, 1
      %p131 = por %p129, %p130
      %p133 = scmp.ne.s32.totalorder %s116, %s132
      %p134 = scmp.eq.s32.totalorder %s19, 0
      %p135 = por %p133, %p134
      %p136 = scmp.le.s32.totalorder 1, %s13
      %p137 = scmp.lt.s32.totalorder %s13, 3
      %p138 = pnand %p136, %p137
      %p139 = pneg %p138
      // Predicated region
      $region9: #{tpu_custom_call.1} parent=5 // pred_check
        _
      $region10: #{tpu_custom_call.1} parent=5 // pred_check_branch
        %141 = sbr.rel (%p138) target = $region12
      $region11: #{tpu_custom_call.1} parent=5 // pred_region
        %s142 = ssub.s32 %s13, 1
        // Predicated region
        $region13: #{tpu_custom_call.1} parent=11 // pred_check
          %p143 = pneg %p60
        $region14: #{tpu_custom_call.1} parent=11 // pred_check_branch
          %145 = sbr.rel (%p143) target = $region16
        $region15: #{tpu_custom_call.1} parent=11 // pred_region
          _
        $region16: #{tpu_custom_call.1} parent=11 // pred_fallthru
          _
        // Predicated region
        $region17: #{tpu_custom_call.1} parent=11 // pred_check
          %p146 = pneg %p81
        $region18: #{tpu_custom_call.1} parent=11 // pred_check_branch
          %148 = sbr.rel (%p146) target = $region20
        $region19: #{tpu_custom_call.1} parent=11 // pred_region
          _
        $region20: #{tpu_custom_call.1} parent=11 // pred_fallthru
          _
        // Predicated region
        $region21: #{tpu_custom_call.1} parent=11 // pred_check
          %p149 = pneg %p102
        $region22: #{tpu_custom_call.1} parent=11 // pred_check_branch
          %151 = sbr.rel (%p149) target = $region24
        $region23: #{tpu_custom_call.1} parent=11 // pred_region
          _
        $region24: #{tpu_custom_call.1} parent=11 // pred_fallthru
          _
      $region12: #{tpu_custom_call.1} parent=5 // pred_fallthru
        _
      %p152 = scmp.lt.s32.totalorder %s13, 2
      // Predicated region
      $region25: #{tpu_custom_call.1} parent=5 // pred_check
        %p153 = pneg %p152
      $region26: #{tpu_custom_call.1} parent=5 // pred_check_branch
        %155 = sbr.rel (%p153) target = $region28
      $region27: #{tpu_custom_call.1} parent=5 // pred_region
        // Predicated region
        $region29: #{tpu_custom_call.1} parent=27 // pred_check
          %p156 = pneg %p33
        $region30: #{tpu_custom_call.1} parent=27 // pred_check_branch
          %158 = sbr.rel (%p156) target = $region32
        $region31: #{tpu_custom_call.1} parent=27 // pred_region
          %p159 = scmp.lt.s32.totalorder %s13, 1
          %s160 = scalar_select %p159, %s13, 1
          %s161 = smul.addr %s160, 8
          %s162 = scalar_lea.vmem %s0, %s161
        $region32: #{tpu_custom_call.1} parent=27 // pred_fallthru
          _
      $region28: #{tpu_custom_call.1} parent=5 // pred_fallthru
        _
      %p163 = scmp.le.s32.totalorder 1, %s13
      %p164 = scmp.lt.s32.totalorder %s13, 3
      %p165 = pnand %p163, %p164
      %p166 = pneg %p165
      // Predicated region
      $region33: #{tpu_custom_call.1} parent=5 // pred_check
        _
      $region34: #{tpu_custom_call.1} parent=5 // pred_check_branch
        %168 = sbr.rel (%p165) target = $region36
      $region35: #{tpu_custom_call.1} parent=5 // pred_region
        %s169 = ssub.s32 %s13, 1
        %p170 = scmp.lt.s32.totalorder %s18, 1
        %s171 = scalar_select %p170, %s18, 1
        %s172 = smul.addr %s171, 8
        %s173 = scalar_lea.vmem %s0, %s172
        %p174 = pneg %p39
        %p175 = pneg %p36
        %p176 = pneg %p60
        %p177 = pneg %p57
        %p178 = pneg %p81
        %p179 = pneg %p78
        %p180 = pneg %p102
        %p181 = pneg %p99
        %p182 = pneg %p128
        %p183 = pneg %p125
        %s184 = sand.u32 %s115, 1
        %s185 = scalar_lea.sflag [#allocation3], %s184
        %s186 = sand.u32 %s115, 1
        %s187 = smul.addr %s186, 16
        %s188 = scalar_lea.vmem [#allocation2], %s187
        %p189 = scmp.lt.s32.totalorder %s18, 1
        %s190 = scalar_select %p189, %s18, 1
        %s191 = smul.addr %s190, 8
        %s192 = scalar_lea.vmem %s0, %s191
        %v193 = vld [vmem:[%s192] sm:$0xff]
        %v194 = vld [vmem:[%s1] sm:$0xff]
        %v195 = vld [vmem:[%s1 + $0x8] sm:$0xff]
        %v196 = vld [vmem:[%s1 + $0x10] sm:$0xff]
        %v197 = vld [vmem:[%s1 + $0x18] sm:$0xff]
        %v198 = vld [vmem:[%s2] sm:$0x1]
        %v200 = vlaneseq
        %v201 = vshrl.u32 %v200, 7
        %v202 = vsub.s32 0, %v201
        %v203 = vrot.slane %v198, %v202
        %vm205 = vcmask 261120
        %v207 = vsel %vm205, %v193, 0
        %209 = vmatprep.subr.mxu0 0.0
        %210 = vmatpush1.msra.mxu0 %v194
        %211 = vmatprep.subr.mxu0 0.0
        %212 = vmatpush1.msra.mxu0 %v195
        %213 = vmatprep.subr.mxu0 0.0
        %214 = vmatpush1.msra.mxu0 %v196
        %215 = vmatprep.subr.mxu0 0.0
        %216 = vmatpush1.msra.mxu0 %v197
        %217 = vmatprep.subr.mxu0 0.0
        %218 = vmatpush1.msra.mxu0 0.0
        %219 = vmatprep.subr.mxu0 0.0
        %220 = vmatpush1.msra.mxu0 0.0
        %221 = vmatprep.subr.mxu0 0.0
        %222 = vmatpush1.msra.mxu0 0.0
        %223 = vmatprep.subr.mxu0 0.0
        %224 = vmatpush1.msra.mxu0 0.0
        %225 = vmatprep.subr.mxu0 0.0
        %226 = vmatpush1.msra.mxu0 0.0
        %227 = vmatprep.subr.mxu0 0.0
        %228 = vmatpush1.msra.mxu0 0.0
        %229 = vmatprep.subr.mxu0 0.0
        %230 = vmatpush1.msra.mxu0 0.0
        %231 = vmatprep.subr.mxu0 0.0
        %232 = vmatpush1.msra.mxu0 0.0
        %233 = vmatprep.subr.mxu0 0.0
        %234 = vmatpush1.msra.mxu0 0.0
        %235 = vmatprep.subr.mxu0 0.0
        %236 = vmatpush1.msra.mxu0 0.0
        %237 = vmatprep.subr.mxu0 0.0
        %238 = vmatpush1.msra.mxu0 0.0
        %239 = vmatprep.subr.mxu0 0.0
        %240 = vmatpush1.msra.mxu0 0.0
        %241 = vmatprep.subr.mxu0 0.0
        %242 = vmatpush1.msra.mxu0 0.0
        %243 = vmatprep.subr.mxu0 0.0
        %244 = vmatpush1.msra.mxu0 0.0
        %245 = vmatprep.subr.mxu0 0.0
        %246 = vmatpush1.msra.mxu0 0.0
        %247 = vmatprep.subr.mxu0 0.0
        %248 = vmatpush1.msra.mxu0 0.0
        %249 = vmatprep.subr.mxu0 0.0
        %250 = vmatpush1.msra.mxu0 0.0
        %251 = vmatprep.subr.mxu0 0.0
        %252 = vmatpush1.msra.mxu0 0.0
        %253 = vmatprep.subr.mxu0 0.0
        %254 = vmatpush1.msra.mxu0 0.0
        %255 = vmatprep.subr.mxu0 0.0
        %256 = vmatpush1.msra.mxu0 0.0
        %257 = vmatprep.subr.mxu0 0.0
        %258 = vmatpush1.msra.mxu0 0.0
        %259 = vmatprep.subr.mxu0 0.0
        %260 = vmatpush1.msra.mxu0 0.0
        %261 = vmatprep.subr.mxu0 0.0
        %262 = vmatpush1.msra.mxu0 0.0
        %263 = vmatprep.subr.mxu0 0.0
        %264 = vmatpush1.msra.mxu0 0.0
        %265 = vmatprep.subr.mxu0 0.0
        %266 = vmatpush1.msra.mxu0 0.0
        %267 = vmatprep.subr.mxu0 0.0
        %268 = vmatpush1.msra.mxu0 0.0
        %269 = vmatprep.subr.mxu0 0.0
        %270 = vmatpush1.msra.mxu0 0.0
        %271 = vmatprep.subr.mxu0 0.0
        %272 = vmatpush1.msra.mxu0 0.0
        %273 = vmatprep.mubr.f32.mxu0 0.0
        %274 = vmatmul.mubr.f32.gmra.mrb[0].mxu0 %v207
        %v275 = vpop.f32.mrb[0].mxu0
        %v276 = vadd.f32 %v203, %v275
        %v277 = vpop.f32.mrb[0].mxu0
        %278 = vdwg.mxu0
        %v279 = vld [vmem:[%s3] sm:$0xff]
        %vm280 = vcmask 130048
        %v282 = vsel %vm280, %v276, 0
        %v285 = vsel %vm280, %v279, 0
        %287 = vmatprep.subr.mxu0 0.0
        %288 = vmatpush1.xpose.msra.mxu0 %v285
        %289 = vmatprep.subr.mxu0 0.0
        %290 = vmatpush1.xpose.msra.mxu0 0.0
        %291 = vmatprep.subr.mxu0 0.0
        %292 = vmatpush1.xpose.msra.mxu0 0.0
        %293 = vmatprep.subr.mxu0 0.0
        %294 = vmatpush1.xpose.msra.mxu0 0.0
        %295 = vmatprep.subr.mxu0 0.0
        %296 = vmatpush1.xpose.msra.mxu0 0.0
        %297 = vmatprep.subr.mxu0 0.0
        %298 = vmatpush1.xpose.msra.mxu0 0.0
        %299 = vmatprep.subr.mxu0 0.0
        %300 = vmatpush1.xpose.msra.mxu0 0.0
        %301 = vmatprep.subr.mxu0 0.0
        %302 = vmatpush1.xpose.msra.mxu0 0.0
        %303 = vmatprep.subr.mxu0 0.0
        %304 = vmatpush1.xpose.msra.mxu0 0.0
        %305 = vmatprep.subr.mxu0 0.0
        %306 = vmatpush1.xpose.msra.mxu0 0.0
        %307 = vmatprep.subr.mxu0 0.0
        %308 = vmatpush1.xpose.msra.mxu0 0.0
        %309 = vmatprep.subr.mxu0 0.0
        %310 = vmatpush1.xpose.msra.mxu0 0.0
        %311 = vmatprep.subr.mxu0 0.0
        %312 = vmatpush1.xpose.msra.mxu0 0.0
        %313 = vmatprep.subr.mxu0 0.0
        %314 = vmatpush1.xpose.msra.mxu0 0.0
        %315 = vmatprep.subr.mxu0 0.0
        %316 = vmatpush1.xpose.msra.mxu0 0.0
        %317 = vmatprep.subr.mxu0 0.0
        %318 = vmatpush1.xpose.msra.mxu0 0.0
        %319 = vmatprep.subr.mxu0 0.0
        %320 = vmatpush1.xpose.msra.mxu0 0.0
        %321 = vmatprep.subr.mxu0 0.0
        %322 = vmatpush1.xpose.msra.mxu0 0.0
        %323 = vmatprep.subr.mxu0 0.0
        %324 = vmatpush1.xpose.msra.mxu0 0.0
        %325 = vmatprep.subr.mxu0 0.0
        %326 = vmatpush1.xpose.msra.mxu0 0.0
        %327 = vmatprep.subr.mxu0 0.0
        %328 = vmatpush1.xpose.msra.mxu0 0.0
        %329 = vmatprep.subr.mxu0 0.0
        %330 = vmatpush1.xpose.msra.mxu0 0.0
        %331 = vmatprep.subr.mxu0 0.0
        %332 = vmatpush1.xpose.msra.mxu0 0.0
        %333 = vmatprep.subr.mxu0 0.0
        %334 = vmatpush1.xpose.msra.mxu0 0.0
        %335 = vmatprep.subr.mxu0 0.0
        %336 = vmatpush1.xpose.msra.mxu0 0.0
        %337 = vmatprep.subr.mxu0 0.0
        %338 = vmatpush1.xpose.msra.mxu0 0.0
        %339 = vmatprep.subr.mxu0 0.0
        %340 = vmatpush1.xpose.msra.mxu0 0.0
        %341 = vmatprep.subr.mxu0 0.0
        %342 = vmatpush1.xpose.msra.mxu0 0.0
        %343 = vmatprep.subr.mxu0 0.0
        %344 = vmatpush1.xpose.msra.mxu0 0.0
        %345 = vmatprep.subr.mxu0 0.0
        %346 = vmatpush1.xpose.msra.mxu0 0.0
        %347 = vmatprep.subr.mxu0 0.0
        %348 = vmatpush1.xpose.msra.mxu0 0.0
        %349 = vmatprep.subr.mxu0 0.0
        %350 = vmatpush1.xpose.msra.mxu0 0.0
        %351 = vmatprep.mubr.f32.mxu0 0.0
        %352 = vmatmul.mubr.f32.gmra.mrb[0].mxu0 %v282
        %v353 = vpop.f32.mrb[0].mxu0
        %v354 = vadd.f32 0.0, %v353
        %v355 = vpop.f32.mrb[0].mxu0
        %356 = vdwg.mxu0
        %v357 = vmul.f32 %v354, 0.25
        %vm358 = vcmask 64512
        %v359 = vsel %vm358, %v357, -inf
        %360 = vmax.xlane.f32.xlu0 %v359
        %v361 = vpop.xlane.xlu0 %360
        %v362 = vsub.f32 %v357, %v361
        %v363 = vmul.f32 %v362, 1.442695
        %v364 = vpow.pop %v363
        %v365 = vsel %vm358, %v364, 0.0
        %366 = vadd.xlane.f32.xlu0 %v365
        %v367 = vpop.xlane.xlu0 %366
        %v368 = vrcp.pop %v367
        %v369 = vmul.f32 %v367, %v368
        %v370 = vsub.f32 2.0, %v369
        %v371 = vmul.f32 %v368, %v370
        %v372 = vmul.f32 %v364, %v371
        %v374 = vsel %vm358, %v372, 0
        %376 = vmatprep.subr.mxu0 0.0
        %377 = vmatpush1.msra.mxu0 %v279
        %378 = vmatprep.subr.mxu0 0.0
        %379 = vmatpush1.msra.mxu0 0.0
        %380 = vmatprep.subr.mxu0 0.0
        %381 = vmatpush1.msra.mxu0 0.0
        %382 = vmatprep.subr.mxu0 0.0
        %383 = vmatpush1.msra.mxu0 0.0
        %384 = vmatprep.subr.mxu0 0.0
        %385 = vmatpush1.msra.mxu0 0.0
        %386 = vmatprep.subr.mxu0 0.0
        %387 = vmatpush1.msra.mxu0 0.0
        %388 = vmatprep.subr.mxu0 0.0
        %389 = vmatpush1.msra.mxu0 0.0
        %390 = vmatprep.subr.mxu0 0.0
        %391 = vmatpush1.msra.mxu0 0.0
        %392 = vmatprep.subr.mxu0 0.0
        %393 = vmatpush1.msra.mxu0 0.0
        %394 = vmatprep.subr.mxu0 0.0
        %395 = vmatpush1.msra.mxu0 0.0
        %396 = vmatprep.subr.mxu0 0.0
        %397 = vmatpush1.msra.mxu0 0.0
        %398 = vmatprep.subr.mxu0 0.0
        %399 = vmatpush1.msra.mxu0 0.0
        %400 = vmatprep.subr.mxu0 0.0
        %401 = vmatpush1.msra.mxu0 0.0
        %402 = vmatprep.subr.mxu0 0.0
        %403 = vmatpush1.msra.mxu0 0.0
        %404 = vmatprep.subr.mxu0 0.0
        %405 = vmatpush1.msra.mxu0 0.0
        %406 = vmatprep.subr.mxu0 0.0
        %407 = vmatpush1.msra.mxu0 0.0
        %408 = vmatprep.subr.mxu0 0.0
        %409 = vmatpush1.msra.mxu0 0.0
        %410 = vmatprep.subr.mxu0 0.0
        %411 = vmatpush1.msra.mxu0 0.0
        %412 = vmatprep.subr.mxu0 0.0
        %413 = vmatpush1.msra.mxu0 0.0
        %414 = vmatprep.subr.mxu0 0.0
        %415 = vmatpush1.msra.mxu0 0.0
        %416 = vmatprep.subr.mxu0 0.0
        %417 = vmatpush1.msra.mxu0 0.0
        %418 = vmatprep.subr.mxu0 0.0
        %419 = vmatpush1.msra.mxu0 0.0
        %420 = vmatprep.subr.mxu0 0.0
        %421 = vmatpush1.msra.mxu0 0.0
        %422 = vmatprep.subr.mxu0 0.0
        %423 = vmatpush1.msra.mxu0 0.0
        %424 = vmatprep.subr.mxu0 0.0
        %425 = vmatpush1.msra.mxu0 0.0
        %426 = vmatprep.subr.mxu0 0.0
        %427 = vmatpush1.msra.mxu0 0.0
        %428 = vmatprep.subr.mxu0 0.0
        %429 = vmatpush1.msra.mxu0 0.0
        %430 = vmatprep.subr.mxu0 0.0
        %431 = vmatpush1.msra.mxu0 0.0
        %432 = vmatprep.subr.mxu0 0.0
        %433 = vmatpush1.msra.mxu0 0.0
        %434 = vmatprep.subr.mxu0 0.0
        %435 = vmatpush1.msra.mxu0 0.0
        %436 = vmatprep.subr.mxu0 0.0
        %437 = vmatpush1.msra.mxu0 0.0
        %438 = vmatprep.subr.mxu0 0.0
        %439 = vmatpush1.msra.mxu0 0.0
        %440 = vmatprep.mubr.f32.mxu0 0.0
        %441 = vmatmul.mubr.f32.gmra.mrb[0].mxu0 %v374
        %v442 = vpop.f32.mrb[0].mxu0
        %v443 = vadd.f32 0.0, %v442
        %v444 = vpop.f32.mrb[0].mxu0
        %445 = vdwg.mxu0
        %446 = vst [vmem:[%s188] sm:$0xff] 0.0
        %447 = vst [vmem:[%s188 + $0x8] sm:$0xff] 0.0
        %448 = vst.msk [vmem:[%s188] sm:$0xff] %vm358, %v372
        %449 = vst.msk [vmem:[%s188 + $0x8] sm:$0xff] %vm280, %v443
        %s450 = sand.u32 %s115, 1
        %s451 = scalar_lea.sflag [#allocation3], %s450
        %s452 = sand.u32 %s115, 1
        %s453 = smul.addr %s452, 16
        %s454 = scalar_lea.vmem [#allocation2], %s453
        // Predicated region
        $region37: #{tpu_custom_call.1} parent=35 // pred_check
          %p455 = pneg %p125
        $region38: #{tpu_custom_call.1} parent=35 // pred_check_branch
          %457 = sbr.rel (%p455) target = $region40
        $region39: #{tpu_custom_call.1} parent=35 // pred_region
          %s459 = ssub.s32 256, 256
          %460 = vsyncadd %s451, %s459
          %s461 = smul.addr %s18, 2
          %s462 = smul.addr %s461, 128
          %s463 = scalar_lea.hbm %s4, %s462
          %s465 = sshll.u32 %s454, 4
          %s466 = int_to_ptr.vmem [resolvable:$true] %s465
          %468 = dma.vmem_to_hbm [thread:$0]  %s466, 256, %s463, %s451
        $region40: #{tpu_custom_call.1} parent=35 // pred_fallthru
          _
      $region36: #{tpu_custom_call.1} parent=5 // pred_fallthru
        _
      %p469 = scmp.le.s32.totalorder 2, %s13
      // Predicated region
      $region41: #{tpu_custom_call.1} parent=5 // pred_check
        %p470 = pneg %p469
      $region42: #{tpu_custom_call.1} parent=5 // pred_check_branch
        %472 = sbr.rel (%p470) target = $region44
      $region43: #{tpu_custom_call.1} parent=5 // pred_region
        %s473 = ssub.s32 %s13, 2
        // Predicated region
        $region45: #{tpu_custom_call.1} parent=43 // pred_check
          %p474 = pneg %p131
        $region46: #{tpu_custom_call.1} parent=43 // pred_check_branch
          %476 = sbr.rel (%p474) target = $region48
        $region47: #{tpu_custom_call.1} parent=43 // pred_region
          %s477 = sand.u32 %s116, 1
          %s478 = scalar_lea.sflag [#allocation3], %s477
          %s479 = sand.u32 %s116, 1
          %s480 = smul.addr %s479, 16
          %s481 = scalar_lea.vmem [#allocation2], %s480
          %482 = dma.done %s478, 256
        $region48: #{tpu_custom_call.1} parent=43 // pred_fallthru
          _
      $region44: #{tpu_custom_call.1} parent=5 // pred_fallthru
        _
    $region6: #{tpu_custom_call.1} parent=1 // loop_footer
      %s17 = sadd.s32 1, %s13
    $region7: #{tpu_custom_call.1} parent=1 // loop_footer_branch
      %12 = sbr.rel target = $region3
    $region8: #{tpu_custom_call.1} parent=1 // loop_exit
      _
    %483 = vsyncpa [#allocation3], 1
    %s484 = scalar_lea.sflag [#allocation3], 1
    %485 = vsyncpa %s484, 1

</llo_original>
